<compile_context>
chip_gen: v5e
topology: v5e:2x2
jax: 0.10.0
libtpu: 0.0.40
codegen_flags: <defaults>
</compile_context>

<pallas_src>
import functools
import math

import jax
import jax.numpy as jnp
from jax.experimental import pallas as pl
from jax.experimental.pallas import tpu as pltpu


def _atten_fusion_kernel(x_ref, o_ref, *, scale, n_valid):
    """x_ref: (L, C, TN) VMEM tile; o_ref: (C, TN) VMEM tile."""
    L = x_ref.shape[0]
    TN = o_ref.shape[-1]

    # Lane-validity mask for the (possibly ragged) last tile. Pallas masks the
    # ragged output store, but out-of-bounds input lanes contain garbage, so
    # keep the softmax path finite by zeroing their scores.
    base = pl.program_id(0) * TN
    lane = jax.lax.broadcasted_iota(jnp.int32, (1, TN), 1)
    valid = (base + lane) < n_valid                                # (1, TN)

    q0 = x_ref[0].astype(jnp.float32)                              # (C, TN)

    # Pass 1: per-cav scores (static unroll; L is 2-5), running max.
    scores = []
    m = None
    for l in range(L):
        xl = q0 if l == 0 else x_ref[l].astype(jnp.float32)        # (C, TN)
        s = jnp.sum(xl * q0, axis=0, keepdims=True) * scale        # (1, TN)
        s = jnp.where(valid, s, 0.0)
        scores.append(s)
        m = s if m is None else jnp.maximum(m, s)

    # Pass 2: unnormalized softmax-weighted context, reloading x from VMEM
    # (cheap; avoids holding L live (C, TN) f32 tiles).
    denom = jnp.zeros((1, TN), jnp.float32)
    ctx = jnp.zeros(o_ref.shape, jnp.float32)                      # (C, TN)
    for l in range(L):
        e = jnp.exp(scores[l] - m)                                 # (1, TN)
        denom = denom + e
        ctx = ctx + e * x_ref[l].astype(jnp.float32)

    # One (1, TN) reciprocal + one (C, TN) multiply instead of L*TN divides.
    # Exact (approx=False) to keep tight agreement with the f32 reference.
    inv = pl.reciprocal(denom)                                     # (1, TN)
    o_ref[...] = (ctx * inv).astype(o_ref.dtype)


def atten_fusion(x):
    """x: (cav_num, C, H, W) -> (C, H, W); dtype preserved (f32 or bf16)."""
    L, C, H, W = x.shape
    N = H * W
    xr = x.reshape(L, C, N)

    in_b = jnp.dtype(x.dtype).itemsize

    # ---- tile selection ----
    # Per lane-column VMEM bytes: double-buffered input + output blocks plus
    # in-kernel f32 temporaries (q0, ctx, one xl in flight, L scores, e/denom/m).
    bytes_per_lane = 2 * L * C * in_b + 2 * C * in_b + (3 * C + 2 * L + 4) * 4
    vmem_budget = 24 * 1024 * 1024            # target usage; limit set below
    tn_cap = max(128, (vmem_budget // bytes_per_lane) // 128 * 128)

    n_lane = pl.cdiv(N, 128) * 128            # N rounded up to a lane multiple
    # Aim for >= ~8 grid steps (2 TCs on v7x x 3-4 pipelined iterations) when N
    # is large, but never drop below the ~512-lane HBM-roofline plateau.
    tn_steps = max(512, (N // (8 * 128)) * 128)
    TN = max(128, min(2048, tn_cap, n_lane, tn_steps))

    grid = (pl.cdiv(N, TN),)                  # ragged last tile handled in-kernel
    scale = 1.0 / math.sqrt(C)                # matches ScaledDotProductAttention(dim=C)
    kernel = functools.partial(_atten_fusion_kernel, scale=scale, n_valid=N)

    cost = pl.CostEstimate(
        flops=4 * L * C * N,                  # score + context mul/add
        transcendentals=(L + 1) * N,          # exp + reciprocal
        bytes_accessed=(L * C + C) * N * in_b,
    )

    out = pl.pallas_call(
        kernel,
        out_shape=jax.ShapeDtypeStruct((C, N), x.dtype),
        grid=grid,
        in_specs=[pl.BlockSpec((L, C, TN), lambda n: (0, 0, n))],
        out_specs=pl.BlockSpec((C, TN), lambda n: (0, n)),
        compiler_params=pltpu.CompilerParams(
            dimension_semantics=("parallel",),
            vmem_limit_bytes=32 * 1024 * 1024,   # explicit: safe on v5e/v6e/v7x
        ),
        cost_estimate=cost,
    )(xr)

    return out.reshape(C, H, W)


def atten_fusion_ref(x):
    """Pure-JAX reference mirroring the PyTorch module exactly."""
    L, C, H, W = x.shape
    xf = x.reshape(L, C, -1).transpose(2, 0, 1)              # (N, L, C)
    score = jnp.einsum('nlc,nmc->nlm', xf, xf) / math.sqrt(C)
    attn = jax.nn.softmax(score, axis=-1)
    ctx = jnp.einsum('nlm,nmc->nlc', attn, xf)
    out = ctx.transpose(1, 2, 0).reshape(L, C, H, W)[0]
    return out


if __name__ == "__main__":
    key = jax.random.PRNGKey(0)
    cav_num, C, H, W = 2, 4, 16, 16
    x = jax.random.normal(key, (cav_num, C, H, W), dtype=jnp.float32)

    y = atten_fusion(x)
    y = jax.block_until_ready(y)

    y_ref = atten_fusion_ref(x)
    assert y.shape == (C, H, W), y.shape
    assert jnp.allclose(y, y_ref, atol=1e-5, rtol=1e-5), (
        float(jnp.max(jnp.abs(y - y_ref))))
    print("KERNEL_OK")
</pallas_src>

<mosaic_0001>
module attributes {stable_mosaic.version = 11 : i64} {
  func.func @_atten_fusion_kernel(%arg0: i32, %arg1: memref<2x4x256xf32, #tpu.memory_space<vmem>>, %arg2: memref<4x256xf32, #tpu.memory_space<vmem>>) attributes {dimension_semantics = [#tpu.dimension_semantics<parallel>], iteration_bounds = array<i64: 1>, scalar_prefetch = 0 : i64, scratch_operands = 0 : i64, tpu.core_type = #tpu.core_type<tc>, window_params = [{transform_indices = @transform_0, window_bounds = array<i64: 2, 4, 256>}, {transform_indices = @transform_1, window_bounds = array<i64: 4, 256>}]} {
    %c256_i32 = arith.constant 256 : i32
    %0 = arith.muli %arg0, %c256_i32 : i32
    %1 = tpu.iota {dimensions = array<i32: 1>} : vector<1x256xi32>
    %2 = vector.broadcast %0 : i32 to vector<1x256xi32>
    %3 = arith.addi %2, %1 : vector<1x256xi32>
    %c256_i32_0 = arith.constant 256 : i32
    %4 = vector.broadcast %c256_i32_0 : i32 to vector<1x256xi32>
    %5 = arith.cmpi slt, %3, %4 : vector<1x256xi32>
    %c0 = arith.constant 0 : index
    %c0_1 = arith.constant 0 : index
    %c0_2 = arith.constant 0 : index
    %6 = vector.load %arg1[%c0, %c0_1, %c0_2] : memref<2x4x256xf32, #tpu.memory_space<vmem>>, vector<1x4x256xf32>
    %7 = vector.shape_cast %6 : vector<1x4x256xf32> to vector<4x256xf32>
    %8 = arith.mulf %7, %7 : vector<4x256xf32>
    %cst = arith.constant dense<0.000000e+00> : vector<256xf32>
    %9 = vector.multi_reduction <add>, %8, %cst [0] : vector<4x256xf32> to vector<256xf32>
    %10 = vector.shape_cast %9 : vector<256xf32> to vector<1x256xf32>
    %cst_3 = arith.constant 5.000000e-01 : f32
    %11 = vector.broadcast %cst_3 : f32 to vector<1x256xf32>
    %12 = arith.mulf %10, %11 : vector<1x256xf32>
    %cst_4 = arith.constant 0.000000e+00 : f32
    %13 = vector.broadcast %cst_4 : f32 to vector<1x256xf32>
    %14 = arith.select %5, %12, %13 : vector<1x256xi1>, vector<1x256xf32>
    %c1 = arith.constant 1 : index
    %c0_5 = arith.constant 0 : index
    %c0_6 = arith.constant 0 : index
    %15 = vector.load %arg1[%c1, %c0_5, %c0_6] : memref<2x4x256xf32, #tpu.memory_space<vmem>>, vector<1x4x256xf32>
    %16 = vector.shape_cast %15 : vector<1x4x256xf32> to vector<4x256xf32>
    %17 = arith.mulf %16, %7 : vector<4x256xf32>
    %cst_7 = arith.constant dense<0.000000e+00> : vector<256xf32>
    %18 = vector.multi_reduction <add>, %17, %cst_7 [0] : vector<4x256xf32> to vector<256xf32>
    %19 = vector.shape_cast %18 : vector<256xf32> to vector<1x256xf32>
    %cst_8 = arith.constant 5.000000e-01 : f32
    %20 = vector.broadcast %cst_8 : f32 to vector<1x256xf32>
    %21 = arith.mulf %19, %20 : vector<1x256xf32>
    %cst_9 = arith.constant 0.000000e+00 : f32
    %22 = vector.broadcast %cst_9 : f32 to vector<1x256xf32>
    %23 = arith.select %5, %21, %22 : vector<1x256xi1>, vector<1x256xf32>
    %24 = arith.maximumf %14, %23 : vector<1x256xf32>
    %cst_10 = arith.constant 0.000000e+00 : f32
    %25 = vector.broadcast %cst_10 : f32 to vector<1x256xf32>
    %cst_11 = arith.constant 0.000000e+00 : f32
    %26 = vector.broadcast %cst_11 : f32 to vector<4x256xf32>
    %27 = arith.subf %14, %24 : vector<1x256xf32>
    %28 = math.exp %27 : vector<1x256xf32>
    %29 = arith.addf %25, %28 : vector<1x256xf32>
    %c0_12 = arith.constant 0 : index
    %c0_13 = arith.constant 0 : index
    %c0_14 = arith.constant 0 : index
    %30 = vector.load %arg1[%c0_12, %c0_13, %c0_14] : memref<2x4x256xf32, #tpu.memory_space<vmem>>, vector<1x4x256xf32>
    %31 = vector.shape_cast %30 : vector<1x4x256xf32> to vector<4x256xf32>
    %32 = vector.broadcast %28 : vector<1x256xf32> to vector<4x256xf32>
    %33 = arith.mulf %32, %31 : vector<4x256xf32>
    %34 = arith.addf %26, %33 : vector<4x256xf32>
    %35 = arith.subf %23, %24 : vector<1x256xf32>
    %36 = math.exp %35 : vector<1x256xf32>
    %37 = arith.addf %29, %36 : vector<1x256xf32>
    %c1_15 = arith.constant 1 : index
    %c0_16 = arith.constant 0 : index
    %c0_17 = arith.constant 0 : index
    %38 = vector.load %arg1[%c1_15, %c0_16, %c0_17] : memref<2x4x256xf32, #tpu.memory_space<vmem>>, vector<1x4x256xf32>
    %39 = vector.shape_cast %38 : vector<1x4x256xf32> to vector<4x256xf32>
    %40 = vector.broadcast %36 : vector<1x256xf32> to vector<4x256xf32>
    %41 = arith.mulf %40, %39 : vector<4x256xf32>
    %42 = arith.addf %34, %41 : vector<4x256xf32>
    %43 = tpu.reciprocal %37 : vector<1x256xf32> -> vector<1x256xf32>
    %44 = vector.broadcast %43 : vector<1x256xf32> to vector<4x256xf32>
    %45 = arith.mulf %42, %44 : vector<4x256xf32>
    %c0_18 = arith.constant 0 : index
    %c0_19 = arith.constant 0 : index
    %46 = vector.load %arg2[%c0_18, %c0_19] : memref<4x256xf32, #tpu.memory_space<vmem>>, vector<4x256xf32>
    tpu.vector_store %arg2[%c0_18, %c0_19], %45 {strides = array<i32>} : memref<4x256xf32, #tpu.memory_space<vmem>>, vector<4x256xf32>,
    return
  }
  func.func @transform_0(%arg0: i32) -> (i32, i32, i32) {
    %c0_i32 = arith.constant 0 : i32
    %c0_i32_0 = arith.constant 0 : i32
    %c0_i32_1 = arith.constant 0 : i32
    return %c0_i32, %c0_i32_0, %arg0 : i32, i32, i32
  }
  func.func @transform_1(%arg0: i32) -> (i32, i32) {
    %c0_i32 = arith.constant 0 : i32
    %c0_i32_0 = arith.constant 0 : i32
    return %c0_i32, %arg0 : i32, i32
  }
}

</mosaic_0001>

<llo_original>
// kernel: tpu_custom_call.1
$region0: #{tpu_custom_call.1}
  #allocation0 [shape = 'u32[]', space=smem, size = 0x4, offset = 0x4, fixed_abs, tag = 'smem constant byte address 0x4 - core index']
  #allocation1 [shape = 'u32[72,128]{1,0:T(1,128)}', space=vmem, size = 0x9000, scoped, tag = 'internal scratch']
  %s0 = inlined_call_operand.hbm [shape: f32[2,4,256], index: 0, kind: input, shape index: {}]
  %s1 = inlined_call_operand.hbm [shape: f32[4,256], index: 1, kind: output, shape index: {}]
  %s2 = sld [smem:[#allocation0]]
  $region18: #{tpu_custom_call.1} parent=0
    _
  %s4 = ssub.s32 1, %s2
  %s5 = scalar_select 0, %s4, %s2
  $region1: #{tpu_custom_call.1} parent=0
    #allocation2 [shape = 'u8[8192]{0}', space=vmem, size = 0x2000, scoped, tag = 'input window, operand 0, single buffered']
    #allocation3 [shape = 's32[1]{0}', space=sflag, size = 0x4, scoped, tag = 'scoped memory for tpu_custom_call.1']
    #allocation4 [shape = 's32[1]{0}', space=sflag, size = 0x4, scoped, tag = 'scoped memory for tpu_custom_call.1']
    #allocation5 [shape = 'u8[4096]{0}', space=vmem, size = 0x1000, scoped, tag = 'output window, operand 0, single buffered']
    %6 = vsyncpa [#allocation3], 0
    %7 = vsyncpa [#allocation4], 0
    // Predicated region
    $region2: #{tpu_custom_call.1} parent=1 // pred_check
      _
    $region3: #{tpu_custom_call.1} parent=1 // pred_check_branch
      %9 = sbr.rel (0) target = $region5
    $region4: #{tpu_custom_call.1} parent=1 // pred_region
      %11 = vsyncadd [#allocation3], 0
      %s12 = sshll.u32 %s0, 4
      %s13 = int_to_ptr.hbm [resolvable:$true] %s12
      %s14 = sshll.u32 [#allocation2], 4
      %s15 = int_to_ptr.vmem [resolvable:$true] %s14
      %20 = dma.hbm_to_vmem [thread:$0]  %s13, 256, %s15, [#allocation3], 128, 128, 8
    $region5: #{tpu_custom_call.1} parent=1 // pred_fallthru
      _
    // Predicated region
    $region6: #{tpu_custom_call.1} parent=1 // pred_check
      _
    $region7: #{tpu_custom_call.1} parent=1 // pred_check_branch
      %22 = sbr.rel (0) target = $region9
    $region8: #{tpu_custom_call.1} parent=1 // pred_region
      %24 = dma.done [#allocation3], 256
    $region9: #{tpu_custom_call.1} parent=1 // pred_fallthru
      _
    %s25 = smul.u32 0, 256
    %v26 = vlaneseq
    %v27 = vand.u32 %v26, 127
    %v28 = vadd.s32 %v27, 128
    %v29 = vstv %s25
    %v30 = vadd.s32 %v29, %v27
    %v31 = vadd.s32 %v29, %v28
    %vm32 = vcmp.lt.s32.totalorder %v30, 256
    %vm33 = vcmp.lt.s32.totalorder %v31, 256
    %v34 = vld [vmem:[#allocation2] sm:$0xff]
    %v35 = vmul.f32 %v34, %v34
    %37 = vst [vmem:[#allocation1] ss:$2 sm:$0xff] %v35
    %v38 = vld.sshfl [vmem:[#allocation1] sm:$0xff pattern:$0x75316420]
    %v39 = vld.sshfl [vmem:[#allocation1 + $0x8] sm:$0xff pattern:$0x75316420]
    %vm42 = vcmask 1043456
    %v43 = vsel %vm42, %v38, 0.0
    %v44 = vrot.slane %v43, 4
    %v45 = vadd.f32 %v43, %v44
    %v46 = vrot.slane %v45, 2
    %v47 = vadd.f32 %v45, %v46
    %v48 = vrot.slane %v47, 1
    %v49 = vadd.f32 %v47, %v48
    %v50 = vsel %vm42, %v39, 0.0
    %v51 = vrot.slane %v50, 4
    %v52 = vadd.f32 %v50, %v51
    %v53 = vrot.slane %v52, 2
    %v54 = vadd.f32 %v52, %v53
    %v55 = vrot.slane %v54, 1
    %v56 = vadd.f32 %v54, %v55
    %v57 = vmul.f32 %v49, 0.5
    %v58 = vmul.f32 %v56, 0.5
    %v59 = vsel %vm32, %v57, 0.0
    %v60 = vsel %vm33, %v58, 0.0
    %s61 = scalar_lea.vmem [#allocation2], 8
    %v62 = vld [vmem:[%s61] sm:$0xff]
    %v63 = vmul.f32 %v62, %v34
    %65 = vst [vmem:[#allocation1] ss:$2 sm:$0xff] %v63
    %v66 = vld.sshfl [vmem:[#allocation1] sm:$0xff pattern:$0x75316420]
    %v67 = vld.sshfl [vmem:[#allocation1 + $0x8] sm:$0xff pattern:$0x75316420]
    %v70 = vsel %vm42, %v66, 0.0
    %v71 = vrot.slane %v70, 4
    %v72 = vadd.f32 %v70, %v71
    %v73 = vrot.slane %v72, 2
    %v74 = vadd.f32 %v72, %v73
    %v75 = vrot.slane %v74, 1
    %v76 = vadd.f32 %v74, %v75
    %v77 = vsel %vm42, %v67, 0.0
    %v78 = vrot.slane %v77, 4
    %v79 = vadd.f32 %v77, %v78
    %v80 = vrot.slane %v79, 2
    %v81 = vadd.f32 %v79, %v80
    %v82 = vrot.slane %v81, 1
    %v83 = vadd.f32 %v81, %v82
    %v84 = vmul.f32 %v76, 0.5
    %v85 = vmul.f32 %v83, 0.5
    %v86 = vsel %vm32, %v84, 0.0
    %v87 = vsel %vm33, %v85, 0.0
    %v88 = vmax.f32 %v59, %v86
    %v89 = vmax.f32 %v60, %v87
    %v90 = vsub.f32 %v59, %v88
    %v91 = vsub.f32 %v60, %v89
    %v92 = vmul.f32 %v90, 1.442695
    %v93 = vpow.pop %v92
    %v94 = vmul.f32 %v91, 1.442695
    %v95 = vpow.pop %v94
    %v96 = vadd.f32 %v93, 0.0
    %v97 = vadd.f32 %v95, 0.0
    %99 = vst [vmem:[#allocation1] ss:$2 sm:$0xff] %v34
    %v100 = vld.sshfl [vmem:[#allocation1] sm:$0xff pattern:$0x75316420]
    %v101 = vld.sshfl [vmem:[#allocation1 + $0x8] sm:$0xff pattern:$0x75316420]
    %v104 = vmul.f32 %v93, %v100
    %v105 = vmul.f32 %v95, %v101
    %v106 = vadd.f32 %v104, 0.0
    %v107 = vadd.f32 %v105, 0.0
    %v108 = vsub.f32 %v86, %v88
    %v109 = vsub.f32 %v87, %v89
    %v110 = vmul.f32 %v108, 1.442695
    %v111 = vpow.pop %v110
    %v112 = vmul.f32 %v109, 1.442695
    %v113 = vpow.pop %v112
    %v114 = vadd.f32 %v96, %v111
    %v115 = vadd.f32 %v97, %v113
    %117 = vst [vmem:[#allocation1] ss:$2 sm:$0xff] %v62
    %v118 = vld.sshfl [vmem:[#allocation1] sm:$0xff pattern:$0x75316420]
    %v119 = vld.sshfl [vmem:[#allocation1 + $0x8] sm:$0xff pattern:$0x75316420]
    %v122 = vmul.f32 %v111, %v118
    %v123 = vmul.f32 %v113, %v119
    %v124 = vadd.f32 %v106, %v122
    %v125 = vadd.f32 %v107, %v123
    %v126 = vrcp.pop %v114
    %v127 = vmul.f32 %v114, %v126
    %v128 = vsub.f32 1.0, %v127
    %v129 = vmul.f32 %v126, %v128
    %v130 = vadd.f32 %v126, %v129
    %vm131 = vweird.f32 %v114
    %vm132 = vweird.f32 %v126
    %vm133 = vmor %vm131, %vm132
    %v134 = vsel %vm133, %v126, %v130
    %v135 = vand.u32 2147483647, %v114
    %vm136 = vcmp.eq.f32.partialorder %v135, 8.507059e+37
    %v137 = vand.u32 %v114, 2147483648
    %v138 = vor.u32 1.1754944e-38, %v137
    %v139 = vsel %vm136, %v138, %v134
    %v140 = vrcp.pop %v115
    %v141 = vmul.f32 %v115, %v140
    %v142 = vsub.f32 1.0, %v141
    %v143 = vmul.f32 %v140, %v142
    %v144 = vadd.f32 %v140, %v143
    %vm145 = vweird.f32 %v115
    %vm146 = vweird.f32 %v140
    %vm147 = vmor %vm145, %vm146
    %v148 = vsel %vm147, %v140, %v144
    %v149 = vand.u32 2147483647, %v115
    %vm150 = vcmp.eq.f32.partialorder %v149, 8.507059e+37
    %v151 = vand.u32 %v115, 2147483648
    %v152 = vor.u32 1.1754944e-38, %v151
    %v153 = vsel %vm150, %v152, %v148
    %v154 = vmul.f32 %v124, %v139
    %v155 = vmul.f32 %v125, %v153
    %v158 = vrot.slane %v155, 4
    %v159 = vsel %vm42, %v154, %v158
    %161 = vst [vmem:[#allocation5] sm:$0xff] %v159
    // Predicated region
    $region10: #{tpu_custom_call.1} parent=1 // pred_check
      _
    $region11: #{tpu_custom_call.1} parent=1 // pred_check_branch
      %163 = sbr.rel (0) target = $region13
    $region12: #{tpu_custom_call.1} parent=1 // pred_region
      %165 = vsyncadd [#allocation4], 0
      %s167 = sshll.u32 [#allocation5], 4
      %s168 = int_to_ptr.vmem [resolvable:$true] %s167
      %s169 = sshll.u32 %s1, 4
      %s170 = int_to_ptr.hbm [resolvable:$true] %s169
      %172 = dma.vmem_to_hbm [thread:$0]  %s168, 128, %s170, [#allocation4]
    $region13: #{tpu_custom_call.1} parent=1 // pred_fallthru
      _
    // Predicated region
    $region14: #{tpu_custom_call.1} parent=1 // pred_check
      _
    $region15: #{tpu_custom_call.1} parent=1 // pred_check_branch
      %174 = sbr.rel (0) target = $region17
    $region16: #{tpu_custom_call.1} parent=1 // pred_region
      %176 = dma.done [#allocation4], 128
    $region17: #{tpu_custom_call.1} parent=1 // pred_fallthru
      _
    %177 = vsyncpa [#allocation3], 1
    %178 = vsyncpa [#allocation4], 1

</llo_original>
